<compile_context>
chip_gen: v5e
topology: v5e:2x2
jax: 0.10.0
libtpu: 0.0.40
codegen_flags: <defaults>
</compile_context>

<pallas_src>
import jax
import jax.numpy as jnp
from jax.experimental import pallas as pl
from jax.experimental.pallas import tpu as pltpu


LANE = 128
MIB = 1024 * 1024


def _adaptive_threshold_kernel(thr_ref, x_ref, o_ref):
    # thr_ref: (1,) f32 threshold in SMEM.
    # x_ref / o_ref: VMEM tiles in the tensor's native dtype.
    t = thr_ref[0]
    x = x_ref[...].astype(jnp.float32)
    z = 10.0 * (x - t)
    # Exact sigmoid: exp rides the EUP slot; the kernel is HBM-bound so the
    # exact divide costs nothing on wall-clock and keeps full f32 accuracy.
    y = 1.0 / (1.0 + jnp.exp(-z))
    o_ref[...] = y.astype(o_ref.dtype)


def _round_up(v, m):
    return ((v + m - 1) // m) * m


def _chip_config():
    """Generation-aware (block_bytes, min_grid_blocks, vmem_limit_bytes)."""
    kind = ""
    try:
        kind = jax.devices()[0].device_kind.lower()
    except Exception:
        pass
    if "v7" in kind or "7x" in kind:
        # 3.2 TB/s HBM -> big blocks to amortize the ~0.35us per-step cost,
        # and at least 2 grid blocks so both TensorCores issue DMA.
        return 6 * MIB, 2, 40 * MIB
    if "v6" in kind:
        return 4 * MIB, 1, 32 * MIB
    # v5e / unknown / interpret: 2 MiB blocks (already ~85% of HBM roofline),
    # 4x double-buffered footprint stays well inside the 16 MiB scoped default.
    return 2 * MIB, 1, 16 * MIB


def _layout_2d(n, itemsize, block_bytes, min_blocks):
    """Lane-dense (rows, width) slab + row block size for n % 128 == 0."""
    sublane = max(8, 32 // itemsize)  # 8 for f32, 16 for bf16, 32 for int8/fp8
    width = LANE
    for w in (2048, 1024, 512, 256, 128):
        if n % w == 0:
            width = w
            break
    rows = n // width

    br = max(1, block_bytes // (width * itemsize))
    br = max(sublane, (br // sublane) * sublane)  # dtype-native sublane tile
    if min_blocks > 1 and rows > sublane:
        # Guarantee >= min_blocks grid steps (v7x: one per TensorCore).
        br = min(br, _round_up(pl.cdiv(rows, min_blocks), sublane))
    if br >= rows:
        br = rows  # single full-extent block (always a legal block shape)
    return width, rows, br


def adaptive_threshold(x, threshold, *, donate_input=False):
    """y = sigmoid(10 * (x - threshold)), elementwise. Any shape / dtype."""
    orig_shape = x.shape
    dtype = x.dtype
    n = x.size
    itemsize = jnp.dtype(dtype).itemsize
    block_bytes, min_blocks, vmem_limit = _chip_config()

    thr = jnp.asarray(threshold, dtype=jnp.float32).reshape(1)
    xf = x.reshape(-1)

    cost = pl.CostEstimate(
        flops=5 * n, transcendentals=n, bytes_accessed=2 * n * itemsize
    )
    # Reuse the input HBM buffer only when the caller actually donates x.
    io_alias = {1: 0} if donate_input else {}
    cparams = pltpu.CompilerParams(
        dimension_semantics=("parallel",),  # v7x: shard grid across both TCs
        vmem_limit_bytes=vmem_limit,
    )

    if n % LANE == 0:
        # Common case: lane-dense 2-D slab, tiled along rows.
        width, rows, block_rows = _layout_2d(n, itemsize, block_bytes, min_blocks)
        x2d = xf.reshape(rows, width)
        out = pl.pallas_call(
            _adaptive_threshold_kernel,
            out_shape=jax.ShapeDtypeStruct((rows, width), dtype),
            grid_spec=pltpu.PrefetchScalarGridSpec(
                num_scalar_prefetch=0,
                grid=(pl.cdiv(rows, block_rows),),
                in_specs=[
                    pl.BlockSpec(memory_space=pltpu.SMEM),               # threshold
                    pl.BlockSpec((block_rows, width), lambda i: (i, 0)),  # x tile
                ],
                out_specs=pl.BlockSpec((block_rows, width), lambda i: (i, 0)),
            ),
            compiler_params=cparams,
            cost_estimate=cost,
            input_output_aliases=io_alias,
        )(thr, x2d)
    else:
        # Ragged size: no wrapper pad/slice (each is an extra full HBM pass).
        # Run on the flat 1-D view; blocks are a large multiple of 128 and
        # Pallas masks the partial edge block itself.
        block = max(LANE, (block_bytes // itemsize // LANE) * LANE)
        if min_blocks > 1 and n > LANE:
            block = min(block, _round_up(pl.cdiv(n, min_blocks), LANE))
        if block >= n:
            block = n  # full-extent block is always legal
        out = pl.pallas_call(
            _adaptive_threshold_kernel,
            out_shape=jax.ShapeDtypeStruct((n,), dtype),
            grid_spec=pltpu.PrefetchScalarGridSpec(
                num_scalar_prefetch=0,
                grid=(pl.cdiv(n, block),),
                in_specs=[
                    pl.BlockSpec(memory_space=pltpu.SMEM),   # threshold
                    pl.BlockSpec((block,), lambda i: (i,)),  # x tile (1-D)
                ],
                out_specs=pl.BlockSpec((block,), lambda i: (i,)),
            ),
            compiler_params=cparams,
            cost_estimate=cost,
            input_output_aliases=io_alias,
        )(thr, xf)

    return out.reshape(orig_shape)


if __name__ == "__main__":
    key = jax.random.PRNGKey(0)
    # NCHW activation, small shapes (B=2, C=4, H=W=16)
    x = jax.random.normal(key, (2, 4, 16, 16), dtype=jnp.float32)

    # Deterministic parameter init: matches nn.Parameter(torch.tensor(0.5))
    threshold = jnp.float32(0.5)

    y = adaptive_threshold(x, threshold)
    y = jax.block_until_ready(y)

    # Reference: torch.sigmoid(10 * (x - threshold)) in plain JAX.
    y_ref = 1.0 / (1.0 + jnp.exp(-10.0 * (x - threshold)))
    assert y.shape == x.shape and y.dtype == x.dtype
    assert jnp.allclose(y, y_ref, atol=1e-4, rtol=1e-4)

    print("KERNEL_OK")
</pallas_src>

<mosaic_0001>
module attributes {stable_mosaic.version = 11 : i64} {
  func.func @_adaptive_threshold_kernel(%arg0: i32, %arg1: memref<1xf32, #tpu.memory_space<smem>>, %arg2: memref<1x2048xf32, #tpu.memory_space<vmem>>, %arg3: memref<1x2048xf32, #tpu.memory_space<vmem>>) attributes {dimension_semantics = [#tpu.dimension_semantics<parallel>], iteration_bounds = array<i64: 1>, scalar_prefetch = 0 : i64, scratch_operands = 0 : i64, tpu.core_type = #tpu.core_type<tc>, window_params = [{transform_indices = @transform_0, window_bounds = array<i64: 1>}, {transform_indices = @transform_1, window_bounds = array<i64: 1, 2048>}, {transform_indices = @transform_2, window_bounds = array<i64: 1, 2048>}]} {
    %c0 = arith.constant 0 : index
    %0 = memref.load %arg1[%c0] : memref<1xf32, #tpu.memory_space<smem>>
    %c0_0 = arith.constant 0 : index
    %c0_1 = arith.constant 0 : index
    %1 = vector.load %arg2[%c0_0, %c0_1] : memref<1x2048xf32, #tpu.memory_space<vmem>>, vector<1x2048xf32>
    %2 = vector.broadcast %0 : f32 to vector<1x2048xf32>
    %3 = arith.subf %1, %2 : vector<1x2048xf32>
    %cst = arith.constant 1.000000e+01 : f32
    %4 = vector.broadcast %cst : f32 to vector<1x2048xf32>
    %5 = arith.mulf %4, %3 : vector<1x2048xf32>
    %cst_2 = arith.constant 0.000000e+00 : f32
    %6 = vector.broadcast %cst_2 : f32 to vector<1x2048xf32>
    %7 = arith.subf %6, %5 : vector<1x2048xf32>
    %8 = math.exp %7 : vector<1x2048xf32>
    %cst_3 = arith.constant 1.000000e+00 : f32
    %9 = vector.broadcast %cst_3 : f32 to vector<1x2048xf32>
    %10 = arith.addf %9, %8 : vector<1x2048xf32>
    %cst_4 = arith.constant 1.000000e+00 : f32
    %11 = vector.broadcast %cst_4 : f32 to vector<1x2048xf32>
    %12 = arith.divf %11, %10 : vector<1x2048xf32>
    %c0_5 = arith.constant 0 : index
    %c0_6 = arith.constant 0 : index
    %13 = vector.load %arg3[%c0_5, %c0_6] : memref<1x2048xf32, #tpu.memory_space<vmem>>, vector<1x2048xf32>
    tpu.vector_store %arg3[%c0_5, %c0_6], %12 {strides = array<i32>} : memref<1x2048xf32, #tpu.memory_space<vmem>>, vector<1x2048xf32>,
    return
  }
  func.func @transform_0(%arg0: i32) -> i32 {
    %c0_i32 = arith.constant 0 : i32
    %c0_i32_0 = arith.constant 0 : i32
    return %c0_i32 : i32
  }
  func.func @transform_1(%arg0: i32) -> (i32, i32) {
    %c0_i32 = arith.constant 0 : i32
    %c0_i32_0 = arith.constant 0 : i32
    return %arg0, %c0_i32 : i32, i32
  }
  func.func @transform_2(%arg0: i32) -> (i32, i32) {
    %c0_i32 = arith.constant 0 : i32
    %c0_i32_0 = arith.constant 0 : i32
    return %arg0, %c0_i32 : i32, i32
  }
}

</mosaic_0001>

<llo_original>
// kernel: tpu_custom_call.1
$region0: #{tpu_custom_call.1}
  #allocation0 [shape = 'u32[]', space=smem, size = 0x4, offset = 0x4, fixed_abs, tag = 'smem constant byte address 0x4 - core index']
  #allocation1 [shape = 'u32[72,128]{1,0:T(1,128)}', space=vmem, size = 0x9000, scoped, tag = 'internal scratch']
  #allocation2 [shape = 'f32[1]{0:T(128)S(6)}', space=smem, size = 0x200, scoped, tag = 'scoped memory for tpu_custom_call.1']
  %s0 = inlined_call_operand.<no memory space> [shape: f32[1], index: 0, kind: input, shape index: {}]
  %s1 = inlined_call_operand.hbm [shape: f32[1,2048], index: 1, kind: input, shape index: {}]
  %s2 = inlined_call_operand.hbm [shape: f32[1,2048], index: 2, kind: output, shape index: {}]
  %s3 = sld [smem:[#allocation0]]
  $region22: #{tpu_custom_call.1} parent=0
    _
  %s5 = ssub.s32 1, %s3
  %s6 = scalar_select 0, %s5, %s3
  %7 = sst [smem:[#allocation2]] %s0
  $region1: #{tpu_custom_call.1} parent=0
    #allocation3 [shape = 'u8[8192]{0}', space=vmem, size = 0x2000, scoped, tag = 'input window, operand 1, single buffered']
    #allocation4 [shape = 's32[1]{0}', space=sflag, size = 0x4, scoped, tag = 'scoped memory for tpu_custom_call.1']
    #allocation5 [shape = 's32[1]{0}', space=sflag, size = 0x4, scoped, tag = 'scoped memory for tpu_custom_call.1']
    #allocation6 [shape = 'u8[8192]{0}', space=vmem, size = 0x2000, scoped, tag = 'output window, operand 0, single buffered']
    %8 = vsyncpa [#allocation4], 0
    %9 = vsyncpa [#allocation5], 0
    // Predicated region
    $region2: #{tpu_custom_call.1} parent=1 // pred_check
      _
    $region3: #{tpu_custom_call.1} parent=1 // pred_check_branch
      %11 = sbr.rel (0) target = $region5
    $region4: #{tpu_custom_call.1} parent=1 // pred_region
      _
    $region5: #{tpu_custom_call.1} parent=1 // pred_fallthru
      _
    // Predicated region
    $region6: #{tpu_custom_call.1} parent=1 // pred_check
      _
    $region7: #{tpu_custom_call.1} parent=1 // pred_check_branch
      %13 = sbr.rel (0) target = $region9
    $region8: #{tpu_custom_call.1} parent=1 // pred_region
      %15 = vsyncadd [#allocation4], 0
      %s17 = sshll.u32 %s1, 4
      %s18 = int_to_ptr.hbm [resolvable:$true] %s17
      %s19 = sshll.u32 [#allocation3], 4
      %s20 = int_to_ptr.vmem [resolvable:$true] %s19
      %22 = dma.hbm_to_vmem [thread:$0]  %s18, 256, %s20, [#allocation4]
    $region9: #{tpu_custom_call.1} parent=1 // pred_fallthru
      _
    // Predicated region
    $region10: #{tpu_custom_call.1} parent=1 // pred_check
      _
    $region11: #{tpu_custom_call.1} parent=1 // pred_check_branch
      %24 = sbr.rel (0) target = $region13
    $region12: #{tpu_custom_call.1} parent=1 // pred_region
      %26 = dma.done [#allocation4], 256
    $region13: #{tpu_custom_call.1} parent=1 // pred_fallthru
      _
    %s27 = sld [smem:[#allocation2]]
    %v28 = vld [vmem:[#allocation3] sm:$0xff]
    %v29 = vld [vmem:[#allocation3 + $0x8] sm:$0xff]
    %v30 = vstv %s27
    %v31 = vsub.f32 %v28, %v30
    %v32 = vsub.f32 %v29, %v30
    %v33 = vmul.f32 %v31, 10.0
    %v34 = vmul.f32 %v32, 10.0
    %v35 = vsub.f32 0.0, %v33
    %v36 = vsub.f32 0.0, %v34
    %v37 = vmul.f32 %v35, 1.442695
    %v38 = vpow.pop %v37
    %v39 = vmul.f32 %v36, 1.442695
    %v40 = vpow.pop %v39
    %v41 = vadd.f32 %v38, 1.0
    %v42 = vadd.f32 %v40, 1.0
    %v43 = vrcp.pop %v41
    %v44 = vmul.f32 %v41, %v43
    %v45 = vsub.f32 1.0, %v44
    %v46 = vmul.f32 %v43, %v45
    %v47 = vadd.f32 %v43, %v46
    %vm48 = vweird.f32 %v41
    %vm49 = vweird.f32 %v43
    %vm50 = vmor %vm48, %vm49
    %v51 = vsel %vm50, %v43, %v47
    %v52 = vand.u32 2147483647, %v41
    %vm53 = vcmp.eq.f32.partialorder %v52, 8.507059e+37
    %v54 = vand.u32 %v41, 2147483648
    %v55 = vor.u32 1.1754944e-38, %v54
    %v56 = vsel %vm53, %v55, %v51
    %v57 = vmul.f32 1.0, %v56
    %v58 = vrcp.pop %v42
    %v59 = vmul.f32 %v42, %v58
    %v60 = vsub.f32 1.0, %v59
    %v61 = vmul.f32 %v58, %v60
    %v62 = vadd.f32 %v58, %v61
    %vm63 = vweird.f32 %v42
    %vm64 = vweird.f32 %v58
    %vm65 = vmor %vm63, %vm64
    %v66 = vsel %vm65, %v58, %v62
    %v67 = vand.u32 2147483647, %v42
    %vm68 = vcmp.eq.f32.partialorder %v67, 8.507059e+37
    %v69 = vand.u32 %v42, 2147483648
    %v70 = vor.u32 1.1754944e-38, %v69
    %v71 = vsel %vm68, %v70, %v66
    %v72 = vmul.f32 1.0, %v71
    %73 = vst [vmem:[#allocation6] sm:$0xff] %v57
    %74 = vst [vmem:[#allocation6 + $0x8] sm:$0xff] %v72
    // Predicated region
    $region14: #{tpu_custom_call.1} parent=1 // pred_check
      _
    $region15: #{tpu_custom_call.1} parent=1 // pred_check_branch
      %76 = sbr.rel (0) target = $region17
    $region16: #{tpu_custom_call.1} parent=1 // pred_region
      %78 = vsyncadd [#allocation5], 0
      %s80 = sshll.u32 [#allocation6], 4
      %s81 = int_to_ptr.vmem [resolvable:$true] %s80
      %s82 = sshll.u32 %s2, 4
      %s83 = int_to_ptr.hbm [resolvable:$true] %s82
      %85 = dma.vmem_to_hbm [thread:$0]  %s81, 256, %s83, [#allocation5]
    $region17: #{tpu_custom_call.1} parent=1 // pred_fallthru
      _
    // Predicated region
    $region18: #{tpu_custom_call.1} parent=1 // pred_check
      _
    $region19: #{tpu_custom_call.1} parent=1 // pred_check_branch
      %87 = sbr.rel (0) target = $region21
    $region20: #{tpu_custom_call.1} parent=1 // pred_region
      %89 = dma.done [#allocation5], 256
    $region21: #{tpu_custom_call.1} parent=1 // pred_fallthru
      _
    %90 = vsyncpa [#allocation4], 1
    %91 = vsyncpa [#allocation5], 1

</llo_original>
